<compile_context>
chip_gen: v5e
topology: v5e:2x2
jax: 0.10.0
libtpu: 0.0.40
codegen_flags: <defaults>
</compile_context>

<pallas_src>
import functools

import jax
import jax.numpy as jnp
from jax.experimental import pallas as pl
from jax.experimental.pallas import tpu as pltpu

EPS = 1e-5  # PyTorch LayerNorm default


def _layernorm(v, w, b):
    mu = jnp.mean(v, axis=-1, keepdims=True)
    var = jnp.mean((v - mu) ** 2, axis=-1, keepdims=True)
    return (v - mu) * jax.lax.rsqrt(var + EPS) * w + b


# --------------------------- kernel 1: K/V projection ---------------------------
def kv_proj_kernel(y_ref, wk, bk, wv, bv, k_ref, v_ref, *, num_heads: int):
    f32 = jnp.float32
    bf16 = jnp.bfloat16

    yb = y_ref[0].astype(bf16)                     # (TM, D)
    tm, d = yb.shape
    dk = d // num_heads

    k = jnp.dot(yb, wk[...], preferred_element_type=f32) + bk[...]
    v = jnp.dot(yb, wv[...], preferred_element_type=f32) + bv[...]

    # Head split done once here (not per query row tile).  Cast to bf16 BEFORE the
    # relayout to halve the data moved through the XLU.
    k_ref[0] = jnp.swapaxes(k.astype(bf16).reshape(tm, num_heads, dk), 0, 1)
    v_ref[0] = jnp.swapaxes(v.astype(bf16).reshape(tm, num_heads, dk), 0, 1)


# ----------------------- kernel 2: attention + FFN (per tile) -----------------------
def cross_attn_kernel(x_ref, k_ref, v_ref,
                      ln1_w, ln1_b, wq, bq, wo, bo,
                      ln2_w, ln2_b, w1, b1, w2, b2,
                      o_ref, *, num_heads: int, gelu_approx: bool = False):
    f32 = jnp.float32
    bf16 = jnp.bfloat16

    x = x_ref[0].astype(f32)                       # (TN, D)  residual path in f32
    kh = k_ref[0]                                  # (H, M, dk) bf16, pre-projected
    vh = v_ref[0]                                  # (H, M, dk) bf16, pre-projected
    tn, d = x.shape
    dk = d // num_heads

    # ---- pre_norm_attn (f32) ----
    xn = _layernorm(x, ln1_w[...].astype(f32), ln1_b[...].astype(f32))

    # ---- Q projection (1/sqrt(dk) already folded into wq/bq by the wrapper) ----
    q = jnp.dot(xn.astype(bf16), wq[...], preferred_element_type=f32) + bq[...]
    qh = jnp.swapaxes(q.astype(bf16).reshape(tn, num_heads, dk), 0, 1)   # (H, TN, dk)

    # ---- head-batched attention: contraction over dk (lane axis) ----
    dots = jnp.einsum('hnd,hmd->hnm', qh, kh,
                      preferred_element_type=f32)                        # (H, TN, M)
    dots = dots - jnp.max(dots, axis=-1, keepdims=True)
    p = jnp.exp(dots)
    attn = p * pl.reciprocal(jnp.sum(p, axis=-1, keepdims=True), approx=True)

    ctx = jnp.einsum('hnm,hmd->hnd', attn.astype(bf16), vh,
                     preferred_element_type=f32)                         # (H, TN, dk)
    ctx = jnp.swapaxes(ctx, 0, 1).reshape(tn, d)                         # (TN, D)

    out = jnp.dot(ctx.astype(bf16), wo[...], preferred_element_type=f32) + bo[...]
    x1 = x + out                                                         # residual (f32)

    # ---- pre_norm_ff + FeedForward: Linear -> GELU -> Linear ----
    xn2 = _layernorm(x1, ln2_w[...].astype(f32), ln2_b[...].astype(f32))
    hid = jnp.dot(xn2.astype(bf16), w1[...], preferred_element_type=f32) + b1[...]
    # torch nn.GELU default is exact erf; approximate=True (tanh, EUP) optional for v5e.
    hid = jax.nn.gelu(hid, approximate=gelu_approx)
    ff = jnp.dot(hid.astype(bf16), w2[...], preferred_element_type=f32) + b2[...]

    o_ref[0] = (x1 + ff).astype(o_ref.dtype)


# ----------------------------------- wrapper -----------------------------------
def _vmem_capacity_bytes():
    """Best-effort physical VMEM query (capability check, not a compile fallback)."""
    try:
        return int(pltpu.get_tpu_info().vmem_capacity_bytes)
    except Exception:
        return None


def _pick_row_tile(n: int, max_tile: int) -> int:
    """Largest MXU/lane-friendly divisor of n that is <= max_tile (else whole n)."""
    if n <= max_tile:
        return n
    for align in (256, 128, 8):
        t = (max_tile // align) * align
        while t >= align:
            if n % t == 0:
                return t
            t -= align
    return n


def _weight_spec(arr, single_buffer: bool):
    if single_buffer:
        # Whole (small) operand resident in VMEM for the entire grid; not pipelined,
        # so it is not double-buffered.
        return pl.BlockSpec(memory_space=pltpu.MemorySpace.VMEM)
    shape = arr.shape
    return pl.BlockSpec(shape, lambda b, i: (0,) * len(shape))


def cross_attention_layer(x, y, params, *, num_heads,
                          row_tile=None, kv_row_tile=None,
                          vmem_limit_bytes=None,
                          single_buffer_weights=True,
                          gelu_approx=False):
    B, N, D = x.shape
    _, M, _ = y.shape
    D_FF = params['w1'].shape[1]
    H = num_heads
    assert D % H == 0, "d_model must be divisible by the number of heads"
    dk = D // H

    bf16, f32 = jnp.bfloat16, jnp.float32

    # ---- generation-aware tiling / VMEM budget ----
    cap = _vmem_capacity_bytes()
    if vmem_limit_bytes is None:
        vmem_limit_bytes = (64 * 1024 * 1024 if cap is None
                            else min(100 * 1024 * 1024, (cap * 3) // 4))
    if cap is None:
        max_tile = 256
    elif cap <= 64 * 1024 * 1024:     # v7x: 64 MiB VMEM -> keep the (H,TN,M) score small
        max_tile = 128
    else:                             # v5e / v6e: 128 MiB VMEM
        max_tile = 512
    tn = row_tile if row_tile is not None else _pick_row_tile(N, max_tile)
    tm = kv_row_tile if kv_row_tile is not None else _pick_row_tile(M, max_tile)
    assert N % tn == 0 and M % tm == 0, "row tiles must divide the sequence lengths"
    n_tiles = N // tn
    m_tiles = M // tm

    # ---- operand prep: matmul weights in bf16, LN params / biases in f32 ----
    scale = dk ** -0.5
    wq = (params['wq'] * scale).astype(bf16)       # fold 1/sqrt(dk) into the Q projection
    bq = (params['bq'] * scale).astype(f32)
    wk = params['wk'].astype(bf16); bk = params['bk'].astype(f32)
    wv = params['wv'].astype(bf16); bv = params['bv'].astype(f32)
    wo = params['wo'].astype(bf16); bo = params['bo'].astype(f32)
    w1 = params['w1'].astype(bf16); b1 = params['b1'].astype(f32)
    w2 = params['w2'].astype(bf16); b2 = params['b2'].astype(f32)
    ln1_w = params['ln1_w'].astype(f32); ln1_b = params['ln1_b'].astype(f32)
    ln2_w = params['ln2_w'].astype(f32); ln2_b = params['ln2_b'].astype(f32)

    y_itemsize = jnp.dtype(y.dtype).itemsize
    x_itemsize = jnp.dtype(x.dtype).itemsize

    compiler_params = pltpu.CompilerParams(
        dimension_semantics=("parallel", "parallel"),
        vmem_limit_bytes=int(vmem_limit_bytes))

    # ---------------- pass 1: K/V projection, once per (batch, kv tile) ----------------
    kv_cost = pl.CostEstimate(
        flops=int(4 * B * M * D * D),
        transcendentals=0,
        bytes_accessed=int(B * M * D * y_itemsize          # read y
                           + 2 * B * M * D * 2             # write K,V (bf16)
                           + 2 * D * D * 2 + 2 * D * 4))   # wk/wv bf16 + bk/bv f32

    k_heads, v_heads = pl.pallas_call(
        functools.partial(kv_proj_kernel, num_heads=H),
        out_shape=(jax.ShapeDtypeStruct((B, H, M, dk), bf16),
                   jax.ShapeDtypeStruct((B, H, M, dk), bf16)),
        grid_spec=pltpu.PrefetchScalarGridSpec(
            num_scalar_prefetch=0,
            grid=(B, m_tiles),
            in_specs=[
                pl.BlockSpec((1, tm, D), lambda b, i: (b, i, 0)),
                _weight_spec(wk, single_buffer_weights),
                _weight_spec(bk, single_buffer_weights),
                _weight_spec(wv, single_buffer_weights),
                _weight_spec(bv, single_buffer_weights),
            ],
            out_specs=[
                pl.BlockSpec((1, H, tm, dk), lambda b, i: (b, 0, i, 0)),
                pl.BlockSpec((1, H, tm, dk), lambda b, i: (b, 0, i, 0)),
            ]),
        compiler_params=compiler_params,
        cost_estimate=kv_cost,
    )(y, wk, bk, wv, bv)

    # ---------------- pass 2: attention + FFN over query row tiles ----------------
    flops = 2 * B * (N * D * D            # Q proj
                     + 2 * N * M * D      # QK^T + PV (summed over heads)
                     + N * D * D          # out proj
                     + 2 * N * D * D_FF)  # FFN up + down
    transcendentals = B * (H * N * M      # exp
                           + H * N        # softmax reciprocal
                           + N * D_FF     # GELU
                           + 4 * N)       # LayerNorm rsqrt-ish
    weight_bytes = ((2 * D * D + 2 * D * D_FF) * 2       # wq, wo, w1, w2 (bf16)
                    + 4 * D * 4                           # LN weights/biases (f32)
                    + (3 * D + D_FF) * 4)                 # bq, bo, b2, b1 (f32)
    bytes_accessed = (2 * B * N * D * x_itemsize          # read x + write out
                      + 2 * B * M * D * 2                 # K,V (bf16), once per batch
                      + weight_bytes)
    attn_cost = pl.CostEstimate(flops=int(flops),
                                transcendentals=int(transcendentals),
                                bytes_accessed=int(bytes_accessed))

    weight_ops = (ln1_w, ln1_b, wq, bq, wo, bo, ln2_w, ln2_b, w1, b1, w2, b2)

    out = pl.pallas_call(
        functools.partial(cross_attn_kernel, num_heads=H, gelu_approx=gelu_approx),
        out_shape=jax.ShapeDtypeStruct((B, N, D), x.dtype),
        grid_spec=pltpu.PrefetchScalarGridSpec(
            num_scalar_prefetch=0,
            grid=(B, n_tiles),
            in_specs=[
                pl.BlockSpec((1, tn, D), lambda b, i: (b, i, 0)),       # x row tile
                pl.BlockSpec((1, H, M, dk), lambda b, i: (b, 0, 0, 0)),  # K (per batch)
                pl.BlockSpec((1, H, M, dk), lambda b, i: (b, 0, 0, 0)),  # V (per batch)
            ] + [_weight_spec(w, single_buffer_weights) for w in weight_ops],
            out_specs=pl.BlockSpec((1, tn, D), lambda b, i: (b, i, 0)),
        ),
        compiler_params=compiler_params,
        cost_estimate=attn_cost,
    )(x, k_heads, v_heads, *weight_ops)

    return out


# --------------------------------- reference ---------------------------------
def reference_cross_attention(x, y, params, *, num_heads):
    """Pure-JAX (f32) reference of the PyTorch forward pass for verification."""
    def ln(v, w, b):
        mu = jnp.mean(v, axis=-1, keepdims=True)
        var = jnp.mean((v - mu) ** 2, axis=-1, keepdims=True)
        return (v - mu) / jnp.sqrt(var + EPS) * w[0] + b[0]

    B, N, D = x.shape
    M = y.shape[1]
    dk = D // num_heads
    scale = dk ** -0.5

    xn = ln(x, params['ln1_w'], params['ln1_b'])
    q = xn @ params['wq'] + params['bq'][0]
    k = y @ params['wk'] + params['bk'][0]
    v = y @ params['wv'] + params['bv'][0]
    q = q.reshape(B, N, num_heads, dk)
    k = k.reshape(B, M, num_heads, dk)
    v = v.reshape(B, M, num_heads, dk)
    dots = jnp.einsum('bihd,bjhd->bhij', q, k) * scale
    attn = jax.nn.softmax(dots, axis=-1)
    out = jnp.einsum('bhij,bjhd->bihd', attn, v).reshape(B, N, D)
    out = out @ params['wo'] + params['bo'][0]
    x1 = x + out

    xn2 = ln(x1, params['ln2_w'], params['ln2_b'])
    hid = jax.nn.gelu(xn2 @ params['w1'] + params['b1'][0], approximate=False)
    ff = hid @ params['w2'] + params['b2'][0]
    return x1 + ff


def init_params(key, d_model, d_ff):
    ks = jax.random.split(key, 12)
    s = 0.05
    return {
        'ln1_w': 1.0 + 0.1 * jax.random.normal(ks[0], (1, d_model), jnp.float32),
        'ln1_b': 0.05 * jax.random.normal(ks[1], (1, d_model), jnp.float32),
        'wq': s * jax.random.normal(ks[2], (d_model, d_model), jnp.float32),
        'bq': s * jax.random.normal(ks[3], (1, d_model), jnp.float32),
        'wk': s * jax.random.normal(ks[4], (d_model, d_model), jnp.float32),
        'bk': s * jax.random.normal(ks[5], (1, d_model), jnp.float32),
        'wv': s * jax.random.normal(ks[6], (d_model, d_model), jnp.float32),
        'bv': s * jax.random.normal(ks[7], (1, d_model), jnp.float32),
        'wo': s * jax.random.normal(ks[8], (d_model, d_model), jnp.float32),
        'bo': s * jax.random.normal(ks[9], (1, d_model), jnp.float32),
        'ln2_w': 1.0 + 0.1 * jax.random.normal(ks[10], (1, d_model), jnp.float32),
        'ln2_b': 0.05 * jax.random.normal(ks[11], (1, d_model), jnp.float32),
        'w1': s * jax.random.normal(jax.random.fold_in(key, 100), (d_model, d_ff), jnp.float32),
        'b1': s * jax.random.normal(jax.random.fold_in(key, 101), (1, d_ff), jnp.float32),
        'w2': s * jax.random.normal(jax.random.fold_in(key, 102), (d_ff, d_model), jnp.float32),
        'b2': s * jax.random.normal(jax.random.fold_in(key, 103), (1, d_model), jnp.float32),
    }


if __name__ == "__main__":
    B, N, M, D, H = 2, 8, 8, 32, 4   # batch, query seq, kv seq, d_model, heads
    D_FF = 4 * D

    key = jax.random.PRNGKey(0)
    kx, ky, kp = jax.random.split(key, 3)
    x = jax.random.normal(kx, (B, N, D), jnp.float32)
    y = jax.random.normal(ky, (B, M, D), jnp.float32)
    params = init_params(kp, D, D_FF)

    out = jax.block_until_ready(cross_attention_layer(x, y, params, num_heads=H))

    ref = reference_cross_attention(x, y, params, num_heads=H)
    assert out.shape == (B, N, D)
    err = jnp.max(jnp.abs(out - ref))
    # bf16 matmul operands / bf16 K,V storage (f32 accumulation) + approx softmax
    # reciprocal -> looser tolerance than a pure-f32 implementation.
    assert jnp.allclose(out, ref, atol=2e-2, rtol=2e-2), f"max abs err = {err}"

    print("KERNEL_OK")
</pallas_src>

<mosaic_0001>
module attributes {stable_mosaic.version = 11 : i64} {
  func.func @kv_proj_kernel(%arg0: i32, %arg1: i32, %arg2: memref<1x8x32xf32, #tpu.memory_space<vmem>>, %arg3: memref<32x32xbf16, #tpu.memory_space<vmem>>, %arg4: memref<1x32xf32, #tpu.memory_space<vmem>>, %arg5: memref<32x32xbf16, #tpu.memory_space<vmem>>, %arg6: memref<1x32xf32, #tpu.memory_space<vmem>>, %arg7: memref<1x4x8x8xbf16, #tpu.memory_space<vmem>>, %arg8: memref<1x4x8x8xbf16, #tpu.memory_space<vmem>>) attributes {dimension_semantics = [#tpu.dimension_semantics<parallel>, #tpu.dimension_semantics<parallel>], iteration_bounds = array<i64: 2, 1>, scalar_prefetch = 0 : i64, scratch_operands = 0 : i64, tpu.core_type = #tpu.core_type<tc>, window_params = [{transform_indices = @transform_0, window_bounds = array<i64: 1, 8, 32>}, {pipeline_mode = #tpu.pipeline_mode<synchronous>, transform_indices = @transform_1, window_bounds = array<i64: 32, 32>}, {pipeline_mode = #tpu.pipeline_mode<synchronous>, transform_indices = @transform_2, window_bounds = array<i64: 1, 32>}, {pipeline_mode = #tpu.pipeline_mode<synchronous>, transform_indices = @transform_3, window_bounds = array<i64: 32, 32>}, {pipeline_mode = #tpu.pipeline_mode<synchronous>, transform_indices = @transform_4, window_bounds = array<i64: 1, 32>}, {transform_indices = @transform_5, window_bounds = array<i64: 1, 4, 8, 8>}, {transform_indices = @transform_6, window_bounds = array<i64: 1, 4, 8, 8>}]} {
    %c0 = arith.constant 0 : index
    %c0_0 = arith.constant 0 : index
    %c0_1 = arith.constant 0 : index
    %0 = vector.load %arg2[%c0, %c0_0, %c0_1] : memref<1x8x32xf32, #tpu.memory_space<vmem>>, vector<1x8x32xf32>
    %1 = vector.shape_cast %0 : vector<1x8x32xf32> to vector<8x32xf32>
    %2 = arith.truncf %1 : vector<8x32xf32> to vector<8x32xbf16>
    %c0_2 = arith.constant 0 : index
    %c0_3 = arith.constant 0 : index
    %3 = vector.load %arg3[%c0_2, %c0_3] : memref<32x32xbf16, #tpu.memory_space<vmem>>, vector<32x32xbf16>
    %cst = arith.constant dense<0.000000e+00> : vector<8x32xf32>
    %4 = tpu.matmul %2, %3, %cst {dimension_numbers = #tpu.dot_dimension_numbers<[1], [0], [0], [1], [0, 0, 1, 1], [], []>} : vector<8x32xbf16>, vector<32x32xbf16>, vector<8x32xf32> -> vector<8x32xf32>
    %c0_4 = arith.constant 0 : index
    %c0_5 = arith.constant 0 : index
    %5 = vector.load %arg4[%c0_4, %c0_5] : memref<1x32xf32, #tpu.memory_space<vmem>>, vector<1x32xf32>
    %6 = vector.broadcast %5 : vector<1x32xf32> to vector<8x32xf32>
    %7 = arith.addf %4, %6 : vector<8x32xf32>
    %c0_6 = arith.constant 0 : index
    %c0_7 = arith.constant 0 : index
    %8 = vector.load %arg5[%c0_6, %c0_7] : memref<32x32xbf16, #tpu.memory_space<vmem>>, vector<32x32xbf16>
    %cst_8 = arith.constant dense<0.000000e+00> : vector<8x32xf32>
    %9 = tpu.matmul %2, %8, %cst_8 {dimension_numbers = #tpu.dot_dimension_numbers<[1], [0], [0], [1], [0, 0, 1, 1], [], []>} : vector<8x32xbf16>, vector<32x32xbf16>, vector<8x32xf32> -> vector<8x32xf32>
    %c0_9 = arith.constant 0 : index
    %c0_10 = arith.constant 0 : index
    %10 = vector.load %arg6[%c0_9, %c0_10] : memref<1x32xf32, #tpu.memory_space<vmem>>, vector<1x32xf32>
    %11 = vector.broadcast %10 : vector<1x32xf32> to vector<8x32xf32>
    %12 = arith.addf %9, %11 : vector<8x32xf32>
    %13 = arith.truncf %7 : vector<8x32xf32> to vector<8x32xbf16>
    %14 = vector.shape_cast %13 : vector<8x32xbf16> to vector<8x4x8xbf16>
    %15 = tpu.transpose %14, [1, 0, 2] : vector<8x4x8xbf16> -> vector<4x8x8xbf16>
    %c0_11 = arith.constant 0 : index
    %c0_12 = arith.constant 0 : index
    %c0_13 = arith.constant 0 : index
    %c0_14 = arith.constant 0 : index
    %16 = vector.load %arg7[%c0_11, %c0_12, %c0_13, %c0_14] : memref<1x4x8x8xbf16, #tpu.memory_space<vmem>>, vector<1x4x8x8xbf16>
    %17 = vector.shape_cast %16 : vector<1x4x8x8xbf16> to vector<4x8x8xbf16>
    %18 = vector.shape_cast %15 : vector<4x8x8xbf16> to vector<1x4x8x8xbf16>
    tpu.vector_store %arg7[%c0_11, %c0_12, %c0_13, %c0_14], %18 {strides = array<i32>} : memref<1x4x8x8xbf16, #tpu.memory_space<vmem>>, vector<1x4x8x8xbf16>,
    %19 = arith.truncf %12 : vector<8x32xf32> to vector<8x32xbf16>
    %20 = vector.shape_cast %19 : vector<8x32xbf16> to vector<8x4x8xbf16>
    %21 = tpu.transpose %20, [1, 0, 2] : vector<8x4x8xbf16> -> vector<4x8x8xbf16>
    %c0_15 = arith.constant 0 : index
    %c0_16 = arith.constant 0 : index
    %c0_17 = arith.constant 0 : index
    %c0_18 = arith.constant 0 : index
    %22 = vector.load %arg8[%c0_15, %c0_16, %c0_17, %c0_18] : memref<1x4x8x8xbf16, #tpu.memory_space<vmem>>, vector<1x4x8x8xbf16>
    %23 = vector.shape_cast %22 : vector<1x4x8x8xbf16> to vector<4x8x8xbf16>
    %24 = vector.shape_cast %21 : vector<4x8x8xbf16> to vector<1x4x8x8xbf16>
    tpu.vector_store %arg8[%c0_15, %c0_16, %c0_17, %c0_18], %24 {strides = array<i32>} : memref<1x4x8x8xbf16, #tpu.memory_space<vmem>>, vector<1x4x8x8xbf16>,
    return
  }
  func.func @transform_0(%arg0: i32, %arg1: i32) -> (i32, i32, i32) {
    %c0_i32 = arith.constant 0 : i32
    %c0_i32_0 = arith.constant 0 : i32
    return %arg0, %arg1, %c0_i32 : i32, i32, i32
  }
  func.func @transform_1(%arg0: i32, %arg1: i32) -> (i32, i32) {
    %c0_i32 = arith.constant 0 : i32
    %c0_i32_0 = arith.constant 0 : i32
    %c0_i32_1 = arith.constant 0 : i32
    return %c0_i32, %c0_i32_0 : i32, i32
  }
  func.func @transform_2(%arg0: i32, %arg1: i32) -> (i32, i32) {
    %c0_i32 = arith.constant 0 : i32
    %c0_i32_0 = arith.constant 0 : i32
    %c0_i32_1 = arith.constant 0 : i32
    return %c0_i32, %c0_i32_0 : i32, i32
  }
  func.func @transform_3(%arg0: i32, %arg1: i32) -> (i32, i32) {
    %c0_i32 = arith.constant 0 : i32
    %c0_i32_0 = arith.constant 0 : i32
    %c0_i32_1 = arith.constant 0 : i32
    return %c0_i32, %c0_i32_0 : i32, i32
  }
  func.func @transform_4(%arg0: i32, %arg1: i32) -> (i32, i32) {
    %c0_i32 = arith.constant 0 : i32
    %c0_i32_0 = arith.constant 0 : i32
    %c0_i32_1 = arith.constant 0 : i32
    return %c0_i32, %c0_i32_0 : i32, i32
  }
  func.func @transform_5(%arg0: i32, %arg1: i32) -> (i32, i32, i32, i32) {
    %c0_i32 = arith.constant 0 : i32
    %c0_i32_0 = arith.constant 0 : i32
    %c0_i32_1 = arith.constant 0 : i32
    return %arg0, %c0_i32, %arg1, %c0_i32_0 : i32, i32, i32, i32
  }
  func.func @transform_6(%arg0: i32, %arg1: i32) -> (i32, i32, i32, i32) {
    %c0_i32 = arith.constant 0 : i32
    %c0_i32_0 = arith.constant 0 : i32
    %c0_i32_1 = arith.constant 0 : i32
    return %arg0, %c0_i32, %arg1, %c0_i32_0 : i32, i32, i32, i32
  }
}

</mosaic_0001>

<llo_original>
// kernel: tpu_custom_call.1
$region0: #{tpu_custom_call.1}
  #allocation0 [shape = 'u32[]', space=smem, size = 0x4, offset = 0x4, fixed_abs, tag = 'smem constant byte address 0x4 - core index']
  #allocation1 [shape = 'u32[72,128]{1,0:T(1,128)}', space=vmem, size = 0x9000, scoped, tag = 'internal scratch']
  %s0 = inlined_call_operand.hbm [shape: f32[2,8,32], index: 0, kind: input, shape index: {}]
  %s1 = inlined_call_operand.hbm [shape: bf16[32,32], index: 1, kind: input, shape index: {}]
  %s2 = inlined_call_operand.vmem [shape: f32[1,32], index: 2, kind: input, shape index: {}]
  %s3 = inlined_call_operand.hbm [shape: bf16[32,32], index: 3, kind: input, shape index: {}]
  %s4 = inlined_call_operand.vmem [shape: f32[1,32], index: 4, kind: input, shape index: {}]
  %s5 = inlined_call_operand.hbm [shape: bf16[2,4,8,8], index: 5, kind: output, shape index: {0}]
  %s6 = inlined_call_operand.hbm [shape: bf16[2,4,8,8], index: 6, kind: output, shape index: {1}]
  %7 = xla_tuple %s5, %s6
  %s8 = sld [smem:[#allocation0]]
  $region73: #{tpu_custom_call.1} parent=0
    _
  %s10 = ssub.s32 1, %s8
  %s11 = scalar_select 0, %s10, %s8
  $region1: #{tpu_custom_call.1} parent=0
    #allocation2 [shape = 'u8[8192]{0}', space=vmem, size = 0x2000, scoped, tag = 'input window, operand 0']
    #allocation3 [shape = 's32[2]{0}', space=sflag, size = 0x8, scoped, tag = 'scoped memory for tpu_custom_call.1']
    #allocation4 [shape = 's32[2]{0}', space=sflag, size = 0x8, scoped, tag = 'scoped memory for tpu_custom_call.1']
    #allocation5 [shape = 'u8[8192]{0}', space=vmem, size = 0x2000, scoped, tag = 'input window, operand 1, single buffered']
    #allocation6 [shape = 's32[1]{0}', space=sflag, size = 0x4, scoped, tag = 'scoped memory for tpu_custom_call.1']
    #allocation7 [shape = 'u8[8192]{0}', space=vmem, size = 0x2000, scoped, tag = 'input window, operand 3, single buffered']
    #allocation8 [shape = 'u8[16384]{0}', space=vmem, size = 0x4000, scoped, tag = 'output window, operand 0']
    #allocation9 [shape = 'u8[16384]{0}', space=vmem, size = 0x4000, scoped, tag = 'output window, operand 1']
    #allocation10 [shape = 's32[2]{0}', space=sflag, size = 0x8, scoped, tag = 'scoped memory for tpu_custom_call.1']
    %12 = vsyncpa [#allocation3], 0
    %s13 = scalar_lea.sflag [#allocation3], 1
    %14 = vsyncpa %s13, 0
    %15 = vsyncpa [#allocation6], 0
    %16 = vsyncpa [#allocation4], 0
    %s17 = scalar_lea.sflag [#allocation4], 1
    %18 = vsyncpa %s17, 0
    %19 = vsyncpa [#allocation10], 0
    %s20 = scalar_lea.sflag [#allocation10], 1
    %21 = vsyncpa %s20, 0
    loop: start=0, step=1, limit=4
    $region2: #{tpu_custom_call.1} parent=1 // loop_pre_header
      _
    $region3: #{tpu_custom_call.1} parent=1 // loop_header
      %s23 = sphi 0, %s27
      %p24 = scmp.ge.s32.totalorder %s23, 4
      %s30 = sphi 0, %s42
      %s31 = sphi 0, %s38
      %s32 = sphi 0, %s30
      %s33 = sphi 0, %s31
      %s34 = sphi 0, %s32
      %s35 = sphi 0, %s33
      %s47 = sphi 0, %s49
      %s50 = sphi 0, %s47
      %s51 = sphi 0, %s50
      %s67 = sphi 0, %s51
      %s71 = sphi 0, %s71
      %s73 = sphi 0, %s71
      %s74 = sphi 0, %s73
      %s88 = sphi 0, %s74
      %s92 = sphi 0, %s92
      %s94 = sphi 0, %s92
      %s95 = sphi 0, %s94
      %s109 = sphi 0, %s95
      %s113 = sphi 0, %s113
      %s115 = sphi 0, %s113
      %s116 = sphi 0, %s115
      %s130 = sphi 0, %s116
      %s134 = sphi 0, %s134
      %s136 = sphi 0, %s134
      %s137 = sphi 0, %s136
      %s151 = sphi 0, %s137
      %s159 = sphi 0, %s161
      %s162 = sphi 0, %s159
      %s163 = sphi 0, %s162
      %s179 = sphi 0, %s163
      %s187 = sphi 0, %s189
      %s190 = sphi 0, %s187
      %s191 = sphi 0, %s190
      %s207 = sphi 0, %s191
    $region4: #{tpu_custom_call.1} parent=1 // loop_header_branch
      %26 = sbr.rel (%p24) target = $region8
    $region5: #{tpu_custom_call.1} parent=1 // loop_body
      %s28 = ssub.s32 %s23, 1
      %s29 = ssub.s32 %s23, 2
      %s36 = sadd.s32 1, %s31
      %p37 = scmp.ge.s32.totalorder %s36, 1
      %s38 = scalar_select %p37, 0, %s36
      %s39 = sadd.s32 1, %s30
      %s40 = scalar_select %p37, %s39, %s30
      %p41 = scmp.ge.s32.totalorder %s40, 2
      %s42 = scalar_select %p41, 0, %s40
      %s43 = ssub.s32 %s30, %s42
      %s44 = ssub.s32 %s31, %s38
      %s45 = sor.u32 %s43, %s44
      %p46 = scmp.eq.s32.totalorder %s45, 0
      %s48 = sadd.s32 %s47, 1
      %s49 = scalar_select %p46, %s47, %s48
      %p52 = pneg %p46
      %p53 = scmp.eq.s32.totalorder %s23, 1
      %p54 = por %p52, %p53
      %p55 = scmp.ne.s32.totalorder %s47, %s50
      %p56 = scmp.eq.s32.totalorder %s23, 0
      %p57 = por %p55, %p56
      %p58 = scmp.ne.s32.totalorder %s47, %s50
      %p59 = scmp.eq.s32.totalorder %s28, 1
      %p60 = por %p58, %p59
      %p61 = scmp.ne.s32.totalorder %s50, %s51
      %p62 = scmp.eq.s32.totalorder %s28, 0
      %p63 = por %p61, %p62
      %p64 = scmp.ne.s32.totalorder %s50, %s51
      %p65 = scmp.eq.s32.totalorder %s29, 1
      %p66 = por %p64, %p65
      %p68 = scmp.ne.s32.totalorder %s51, %s67
      %p69 = scmp.eq.s32.totalorder %s29, 0
      %p70 = por %p68, %p69
      %s72 = sadd.s32 %s71, 1
      %p75 = scmp.eq.s32.totalorder %s23, 1
      %p76 = scmp.ne.s32.totalorder %s71, %s73
      %p77 = scmp.eq.s32.totalorder %s23, 0
      %p78 = por %p76, %p77
      %p79 = scmp.ne.s32.totalorder %s71, %s73
      %p80 = scmp.eq.s32.totalorder %s28, 1
      %p81 = por %p79, %p80
      %p82 = scmp.ne.s32.totalorder %s73, %s74
      %p83 = scmp.eq.s32.totalorder %s28, 0
      %p84 = por %p82, %p83
      %p85 = scmp.ne.s32.totalorder %s73, %s74
      %p86 = scmp.eq.s32.totalorder %s29, 1
      %p87 = por %p85, %p86
      %p89 = scmp.ne.s32.totalorder %s74, %s88
      %p90 = scmp.eq.s32.totalorder %s29, 0
      %p91 = por %p89, %p90
      %s93 = sadd.s32 %s92, 1
      %p96 = scmp.eq.s32.totalorder %s23, 1
      %p97 = scmp.ne.s32.totalorder %s92, %s94
      %p98 = scmp.eq.s32.totalorder %s23, 0
      %p99 = por %p97, %p98
      %p100 = scmp.ne.s32.totalorder %s92, %s94
      %p101 = scmp.eq.s32.totalorder %s28, 1
      %p102 = por %p100, %p101
      %p103 = scmp.ne.s32.totalorder %s94, %s95
      %p104 = scmp.eq.s32.totalorder %s28, 0
      %p105 = por %p103, %p104
      %p106 = scmp.ne.s32.totalorder %s94, %s95
      %p107 = scmp.eq.s32.totalorder %s29, 1
      %p108 = por %p106, %p107
      %p110 = scmp.ne.s32.totalorder %s95, %s109
      %p111 = scmp.eq.s32.totalorder %s29, 0
      %p112 = por %p110, %p111
      %s114 = sadd.s32 %s113, 1
      %p117 = scmp.eq.s32.totalorder %s23, 1
      %p118 = scmp.ne.s32.totalorder %s113, %s115
      %p119 = scmp.eq.s32.totalorder %s23, 0
      %p120 = por %p118, %p119
      %p121 = scmp.ne.s32.totalorder %s113, %s115
      %p122 = scmp.eq.s32.totalorder %s28, 1
      %p123 = por %p121, %p122
      %p124 = scmp.ne.s32.totalorder %s115, %s116
      %p125 = scmp.eq.s32.totalorder %s28, 0
      %p126 = por %p124, %p125
      %p127 = scmp.ne.s32.totalorder %s115, %s116
      %p128 = scmp.eq.s32.totalorder %s29, 1
      %p129 = por %p127, %p128
      %p131 = scmp.ne.s32.totalorder %s116, %s130
      %p132 = scmp.eq.s32.totalorder %s29, 0
      %p133 = por %p131, %p132
      %s135 = sadd.s32 %s134, 1
      %p138 = scmp.eq.s32.totalorder %s23, 1
      %p139 = scmp.ne.s32.totalorder %s134, %s136
      %p140 = scmp.eq.s32.totalorder %s23, 0
      %p141 = por %p139, %p140
      %p142 = scmp.ne.s32.totalorder %s134, %s136
      %p143 = scmp.eq.s32.totalorder %s28, 1
      %p144 = por %p142, %p143
      %p145 = scmp.ne.s32.totalorder %s136, %s137
      %p146 = scmp.eq.s32.totalorder %s28, 0
      %p147 = por %p145, %p146
      %p148 = scmp.ne.s32.totalorder %s136, %s137
      %p149 = scmp.eq.s32.totalorder %s29, 1
      %p150 = por %p148, %p149
      %p152 = scmp.ne.s32.totalorder %s137, %s151
      %p153 = scmp.eq.s32.totalorder %s29, 0
      %p154 = por %p152, %p153
      %s155 = ssub.s32 %s30, %s42
      %s156 = ssub.s32 %s31, %s38
      %s157 = sor.u32 %s155, %s156
      %p158 = scmp.eq.s32.totalorder %s157, 0
      %s160 = sadd.s32 %s159, 1
      %s161 = scalar_select %p158, %s159, %s160
      %p164 = pneg %p158
      %p165 = scmp.eq.s32.totalorder %s23, 1
      %p166 = por %p164, %p165
      %p167 = scmp.ne.s32.totalorder %s159, %s162
      %p168 = scmp.eq.s32.totalorder %s23, 0
      %p169 = por %p167, %p168
      %p170 = scmp.ne.s32.totalorder %s159, %s162
      %p171 = scmp.eq.s32.totalorder %s28, 1
      %p172 = por %p170, %p171
      %p173 = scmp.ne.s32.totalorder %s162, %s163
      %p174 = scmp.eq.s32.totalorder %s28, 0
      %p175 = por %p173, %p174
      %p176 = scmp.ne.s32.totalorder %s162, %s163
      %p177 = scmp.eq.s32.totalorder %s29, 1
      %p178 = por %p176, %p177
      %p180 = scmp.ne.s32.totalorder %s163, %s179
      %p181 = scmp.eq.s32.totalorder %s29, 0
      %p182 = por %p180, %p181
      %s183 = ssub.s32 %s30, %s42
      %s184 = ssub.s32 %s31, %s38
      %s185 = sor.u32 %s183, %s184
      %p186 = scmp.eq.s32.totalorder %s185, 0
      %s188 = sadd.s32 %s187, 1
      %s189 = scalar_select %p186, %s187, %s188
      %p192 = pneg %p186
      %p193 = scmp.eq.s32.totalorder %s23, 1
      %p194 = por %p192, %p193
      %p195 = scmp.ne.s32.totalorder %s187, %s190
      %p196 = scmp.eq.s32.totalorder %s23, 0
      %p197 = por %p195, %p196
      %p198 = scmp.ne.s32.totalorder %s187, %s190
      %p199 = scmp.eq.s32.totalorder %s28, 1
      %p200 = por %p198, %p199
      %p201 = scmp.ne.s32.totalorder %s190, %s191
      %p202 = scmp.eq.s32.totalorder %s28, 0
      %p203 = por %p201, %p202
      %p204 = scmp.ne.s32.totalorder %s190, %s191
      %p205 = scmp.eq.s32.totalorder %s29, 1
      %p206 = por %p204, %p205
      %p208 = scmp.ne.s32.totalorder %s191, %s207
      %p209 = scmp.eq.s32.totalorder %s29, 0
      %p210 = por %p208, %p209
      %p211 = scmp.le.s32.totalorder 1, %s23
      %p212 = scmp.lt.s32.totalorder %s23, 3
      %p213 = pnand %p211, %p212
      %p214 = pneg %p213
      // Predicated region
      $region9: #{tpu_custom_call.1} parent=5 // pred_check
        _
      $region10: #{tpu_custom_call.1} parent=5 // pred_check_branch
        %216 = sbr.rel (%p213) target = $region12
      $region11: #{tpu_custom_call.1} parent=5 // pred_region
        %s217 = ssub.s32 %s23, 1
        // Predicated region
        $region13: #{tpu_custom_call.1} parent=11 // pred_check
          %p218 = pneg %p84
        $region14: #{tpu_custom_call.1} parent=11 // pred_check_branch
          %220 = sbr.rel (%p218) target = $region16
        $region15: #{tpu_custom_call.1} parent=11 // pred_region
          %222 = vsyncadd [#allocation6], 0
          %s223 = sshll.u32 %s1, 4
          %s224 = int_to_ptr.hbm [resolvable:$true] %s223
          %s225 = sshll.u32 [#allocation5], 4
          %s226 = int_to_ptr.vmem [resolvable:$true] %s225
          %231 = dma.hbm_to_vmem [thread:$0]  %s224, 256, %s226, [#allocation6], 64, 64, 4
        $region16: #{tpu_custom_call.1} parent=11 // pred_fallthru
          _
        // Predicated region
        $region17: #{tpu_custom_call.1} parent=11 // pred_check
          %p232 = pneg %p105
        $region18: #{tpu_custom_call.1} parent=11 // pred_check_branch
          %234 = sbr.rel (%p232) target = $region20
        $region19: #{tpu_custom_call.1} parent=11 // pred_region
          _
        $region20: #{tpu_custom_call.1} parent=11 // pred_fallthru
          _
        // Predicated region
        $region21: #{tpu_custom_call.1} parent=11 // pred_check
          %p235 = pneg %p126
        $region22: #{tpu_custom_call.1} parent=11 // pred_check_branch
          %237 = sbr.rel (%p235) target = $region24
        $region23: #{tpu_custom_call.1} parent=11 // pred_region
          %239 = vsyncadd [#allocation6], 0
          %s240 = sshll.u32 %s3, 4
          %s241 = int_to_ptr.hbm [resolvable:$true] %s240
          %s242 = sshll.u32 [#allocation7], 4
          %s243 = int_to_ptr.vmem [resolvable:$true] %s242
          %248 = dma.hbm_to_vmem [thread:$0]  %s241, 256, %s243, [#allocation6], 64, 64, 4
        $region24: #{tpu_custom_call.1} parent=11 // pred_fallthru
          _
        // Predicated region
        $region25: #{tpu_custom_call.1} parent=11 // pred_check
          %p249 = pneg %p147
        $region26: #{tpu_custom_call.1} parent=11 // pred_check_branch
          %251 = sbr.rel (%p249) target = $region28
        $region27: #{tpu_custom_call.1} parent=11 // pred_region
          _
        $region28: #{tpu_custom_call.1} parent=11 // pred_fallthru
          _
      $region12: #{tpu_custom_call.1} parent=5 // pred_fallthru
        _
      %p252 = scmp.lt.s32.totalorder %s23, 2
      // Predicated region
      $region29: #{tpu_custom_call.1} parent=5 // pred_check
        %p253 = pneg %p252
      $region30: #{tpu_custom_call.1} parent=5 // pred_check_branch
        %255 = sbr.rel (%p253) target = $region32
      $region31: #{tpu_custom_call.1} parent=5 // pred_region
        // Predicated region
        $region33: #{tpu_custom_call.1} parent=31 // pred_check
          %p256 = pneg %p57
        $region34: #{tpu_custom_call.1} parent=31 // pred_check_branch
          %258 = sbr.rel (%p256) target = $region36
        $region35: #{tpu_custom_call.1} parent=31 // pred_region
          %s259 = sand.u32 %s47, 1
          %s260 = scalar_lea.sflag [#allocation3], %s259
          %s261 = sand.u32 %s47, 1
          %s262 = smul.addr %s261, 8
          %s263 = scalar_lea.vmem [#allocation2], %s262
          %265 = vsyncadd %s260, 0
          %s266 = sadd.s32 %s31, %s30
          %s267 = smul.addr %s266, 8
          %s268 = scalar_lea.hbm %s0, %s267
          %s270 = sshll.u32 %s268, 4
          %s271 = int_to_ptr.hbm [resolvable:$true] %s270
          %s272 = sshll.u32 %s263, 4
          %s273 = int_to_ptr.vmem [resolvable:$true] %s272
          %275 = dma.hbm_to_vmem [thread:$0]  %s271, 128, %s273, %s260
        $region36: #{tpu_custom_call.1} parent=31 // pred_fallthru
          _
      $region32: #{tpu_custom_call.1} parent=5 // pred_fallthru
        _
      %p276 = scmp.le.s32.totalorder 1, %s23
      %p277 = scmp.lt.s32.totalorder %s23, 3
      %p278 = pnand %p276, %p277
      %p279 = pneg %p278
      // Predicated region
      $region37: #{tpu_custom_call.1} parent=5 // pred_check
        _
      $region38: #{tpu_custom_call.1} parent=5 // pred_check_branch
        %281 = sbr.rel (%p278) target = $region40
      $region39: #{tpu_custom_call.1} parent=5 // pred_region
        %s282 = ssub.s32 %s23, 1
        %s283 = sand.u32 %s50, 1
        %s284 = scalar_lea.sflag [#allocation3], %s283
        %s285 = sand.u32 %s50, 1
        %s286 = smul.addr %s285, 8
        %s287 = scalar_lea.vmem [#allocation2], %s286
        // Predicated region
        $region41: #{tpu_custom_call.1} parent=39 // pred_check
          %p288 = pneg %p63
        $region42: #{tpu_custom_call.1} parent=39 // pred_check_branch
          %290 = sbr.rel (%p288) target = $region44
        $region43: #{tpu_custom_call.1} parent=39 // pred_region
          %292 = dma.done %s284, 128
        $region44: #{tpu_custom_call.1} parent=39 // pred_fallthru
          _
        // Predicated region
        $region45: #{tpu_custom_call.1} parent=39 // pred_check
          %p293 = pneg %p84
        $region46: #{tpu_custom_call.1} parent=39 // pred_check_branch
          %295 = sbr.rel (%p293) target = $region48
        $region47: #{tpu_custom_call.1} parent=39 // pred_region
          %297 = dma.done [#allocation6], 256
        $region48: #{tpu_custom_call.1} parent=39 // pred_fallthru
          _
        // Predicated region
        $region49: #{tpu_custom_call.1} parent=39 // pred_check
          %p298 = pneg %p126
        $region50: #{tpu_custom_call.1} parent=39 // pred_check_branch
          %300 = sbr.rel (%p298) target = $region52
        $region51: #{tpu_custom_call.1} parent=39 // pred_region
          %302 = dma.done [#allocation6], 256
        $region52: #{tpu_custom_call.1} parent=39 // pred_fallthru
          _
        %s303 = sand.u32 %s50, 1
        %s304 = scalar_lea.sflag [#allocation3], %s303
        %s305 = sand.u32 %s50, 1
        %s306 = smul.addr %s305, 8
        %s307 = scalar_lea.vmem [#allocation2], %s306
        %p308 = pneg %p63
        %p309 = pneg %p60
        %p310 = pneg %p84
        %p311 = pneg %p81
        %p312 = pneg %p105
        %p313 = pneg %p102
        %p314 = pneg %p126
        %p315 = pneg %p123
        %p316 = pneg %p147
        %p317 = pneg %p144
        %p318 = pneg %p175
        %p319 = pneg %p172
        %s320 = sand.u32 %s162, 1
        %s321 = scalar_lea.sflag [#allocation4], %s320
        %s322 = sand.u32 %s162, 1
        %s323 = smul.addr %s322, 16
        %s324 = scalar_lea.vmem [#allocation8], %s323
        %p325 = pneg %p203
        %p326 = pneg %p200
        %s327 = sand.u32 %s190, 1
        %s328 = scalar_lea.sflag [#allocation10], %s327
        %s329 = sand.u32 %s190, 1
        %s330 = smul.addr %s329, 16
        %s331 = scalar_lea.vmem [#allocation9], %s330
        %v333 = vld [vmem:[%s287] sm:$0xff]
        %v334 = vpack.c.bf16 %v333, %v333
        %v335 = vld [vmem:[#allocation5] sm:$0xf]
        %v336 = vld [vmem:[#allocation5 + $0x4] sm:$0xf]
        %v337 = vld [vmem:[#allocation5 + $0x8] sm:$0xf]
        %v338 = vld [vmem:[#allocation5 + $0xc] sm:$0xf]
        %v339 = vld [vmem:[%s2] sm:$0x1]
        %v341 = vperm.slane %v339, 0
        %v347 = vunpack.c.l.b16 %v335
        %v348 = vunpack.c.l.b16 %v336
        %v349 = vunpack.c.l.b16 %v337
        %v350 = vunpack.c.l.b16 %v338
        %v351 = vpack.c.b16 %v348, %v347
        %v352 = vpack.c.b16 %v350, %v349
        %vm355 = vcmask 261120
        %v357 = vsel %vm355, %v334, 0
        %359 = vmatpush.bf16.msra.mxu0 0
        %360 = vmatpush.bf16.msra.mxu0 0
        %361 = vmatpush.bf16.msra.mxu0 0
        %362 = vmatpush.bf16.msra.mxu0 0
        %363 = vmatpush.bf16.msra.mxu0 0
        %364 = vmatpush.bf16.msra.mxu0 0
        %365 = vmatpush.bf16.msra.mxu0 %v352
        %366 = vmatpush.bf16.msra.mxu0 %v351
        %367 = vmatmul.bf16.gmra.mxu0 %v357
        %v368 = vpop.f32.mrf.mxu0
        %v369 = vadd.f32 %v341, %v368
        %v370 = vpop.f32.mrf.mxu0
        %371 = vdwg.mxu0
        %v372 = vld [vmem:[#allocation7] sm:$0xf]
        %v373 = vld [vmem:[#allocation7 + $0x4] sm:$0xf]
        %v374 = vld [vmem:[#allocation7 + $0x8] sm:$0xf]
        %v375 = vld [vmem:[#allocation7 + $0xc] sm:$0xf]
        %v376 = vld [vmem:[%s4] sm:$0x1]
        %v378 = vperm.slane %v376, 0
        %v384 = vunpack.c.l.b16 %v372
        %v385 = vunpack.c.l.b16 %v373
        %v386 = vunpack.c.l.b16 %v374
        %v387 = vunpack.c.l.b16 %v375
        %v388 = vpack.c.b16 %v385, %v384
        %v389 = vpack.c.b16 %v387, %v386
        %392 = vmatpush.bf16.msra.mxu0 0
        %393 = vmatpush.bf16.msra.mxu0 0
        %394 = vmatpush.bf16.msra.mxu0 0
        %395 = vmatpush.bf16.msra.mxu0 0
        %396 = vmatpush.bf16.msra.mxu0 0
        %397 = vmatpush.bf16.msra.mxu0 0
        %398 = vmatpush.bf16.msra.mxu0 %v389
        %399 = vmatpush.bf16.msra.mxu0 %v388
        %400 = vmatmul.bf16.gmra.mxu0 %v357
        %v401 = vpop.f32.mrf.mxu0
        %v402 = vadd.f32 %v378, %v401
        %v403 = vpop.f32.mrf.mxu0
        %404 = vdwg.mxu0
        %v405 = vpack.c.bf16 %v369, %v369
        %407 = vrot.lane.b32.xlu0 %v405, 120
        %v408 = vpop.permute.xlu0 %407
        %409 = vrot.lane.b32.xlu0 %v405, 112
        %v410 = vpop.permute.xlu0 %409
        %411 = vrot.lane.b32.xlu0 %v405, 104
        %v412 = vpop.permute.xlu0 %411
        %v415 = vpack.i.b16 %v408, %v405
        %v416 = vshrl.u32 %v405, 16
        %v417 = vshrl.u32 %v408, 16
        %v418 = vpack.i.b16 %v417, %v416
        %v421 = vpack.i.b16 %v412, %v410
        %v422 = vshrl.u32 %v410, 16
        %v423 = vshrl.u32 %v412, 16
        %v424 = vpack.i.b16 %v423, %v422
        %v427 = vunpack.c.l.s4 1983009808
        %v428 = vunpack.c.0.s8 %v427
        %v429 = vperm.slane %v415, %v428
        %v432 = vunpack.c.l.s4 1983009808
        %v433 = vunpack.c.0.s8 %v432
        %v434 = vperm.slane %v421, %v433
        %v435 = vrot.slane %v434, 4
        %vm436 = vcmask 1047556
        %v437 = vsel %vm436, %v435, %v429
        %v438 = vrot.slane %v429, 4
        %v439 = vsel %vm436, %v434, %v438
        %v441 = vunpack.c.l.s4 1934713408
        %v442 = vunpack.c.0.s8 %v441
        %v443 = vperm.slane %v437, %v442
        %v445 = vunpack.c.l.s4 1934713408
        %v446 = vunpack.c.0.s8 %v445
        %v447 = vperm.slane %v439, %v446
        %v448 = vrot.slane %v443, 4
        %v449 = vsel %vm436, 0, %v448
        %v450 = vrot.slane %v447, 4
        %v451 = vsel %vm436, 0, %v450
        %v454 = vunpack.c.l.s4 1983009808
        %v455 = vunpack.c.0.s8 %v454
        %v456 = vperm.slane %v418, %v455
        %v459 = vunpack.c.l.s4 1983009808
        %v460 = vunpack.c.0.s8 %v459
        %v461 = vperm.slane %v424, %v460
        %v462 = vrot.slane %v461, 4
        %v463 = vsel %vm436, %v462, %v456
        %v464 = vrot.slane %v456, 4
        %v465 = vsel %vm436, %v461, %v464
        %v467 = vunpack.c.l.s4 1934713408
        %v468 = vunpack.c.0.s8 %v467
        %v469 = vperm.slane %v463, %v468
        %v471 = vunpack.c.l.s4 1934713408
        %v472 = vunpack.c.0.s8 %v471
        %v473 = vperm.slane %v465, %v472
        %v474 = vrot.slane %v469, 4
        %v475 = vsel %vm436, 0, %v474
        %v476 = vrot.slane %v473, 4
        %v477 = vsel %vm436, 0, %v476
        %v478 = vsel %vm436, %v450, %v443
        %v480 = vunpack.c.l.s4 1983009808
        %v481 = vunpack.c.0.s8 %v480
        %v482 = vperm.slane %v478, %v481
        %v483 = vrot.slane %v451, 4
        %v484 = vsel %vm436, %v483, %v449
        %v486 = vunpack.c.l.s4 1983009808
        %v487 = vunpack.c.0.s8 %v486
        %v488 = vperm.slane %v484, %v487
        %v489 = vrot.slane %v488, 4
        %v490 = vsel %vm436, %v489, %v482
        %v492 = vunpack.c.l.s4 1934713408
        %v493 = vunpack.c.0.s8 %v492
        %v494 = vperm.slane %v490, %v493
        %v495 = vrot.slane %v494, 4
        %v496 = vsel %vm436, 0, %v495
        %v497 = vsel %vm436, %v476, %v469
        %v499 = vunpack.c.l.s4 1983009808
        %v500 = vunpack.c.0.s8 %v499
        %v501 = vperm.slane %v497, %v500
        %v502 = vrot.slane %v477, 4
        %v503 = vsel %vm436, %v502, %v475
        %v505 = vunpack.c.l.s4 1983009808
        %v506 = vunpack.c.0.s8 %v505
        %v507 = vperm.slane %v503, %v506
        %v508 = vrot.slane %v507, 4
        %v509 = vsel %vm436, %v508, %v501
        %v511 = vunpack.c.l.s4 1934713408
        %v512 = vunpack.c.0.s8 %v511
        %v513 = vperm.slane %v509, %v512
        %v514 = vrot.slane %v513, 4
        %v515 = vsel %vm436, 0, %v514
        %v518 = vpack.i.b16 %v513, %v494
        %v520 = vshrl.u32 %v494, 16
        %v521 = vshrl.u32 %v513, 16
        %v522 = vpack.i.b16 %v521, %v520
        %v526 = vpack.i.b16 %v515, %v496
        %v528 = vshrl.u32 %v496, 16
        %v529 = vshrl.u32 %v515, 16
        %v530 = vpack.i.b16 %v529, %v528
        %vm532 = vcmask 60416
        %533 = vst.msk [vmem:[%s324] sm:$0xf] %vm532, %v518
        %534 = vst.msk [vmem:[%s324 + $0x4] sm:$0xf] %vm532, %v522
        %535 = vst.msk [vmem:[%s324 + $0x8] sm:$0xf] %vm532, %v526
        %536 = vst.msk [vmem:[%s324 + $0xc] sm:$0xf] %vm532, %v530
        %v537 = vpack.c.bf16 %v402, %v402
        %539 = vrot.lane.b32.xlu0 %v537, 120
        %v540 = vpop.permute.xlu0 %539
        %541 = vrot.lane.b32.xlu0 %v537, 112
        %v542 = vpop.permute.xlu0 %541
        %543 = vrot.lane.b32.xlu0 %v537, 104
        %v544 = vpop.permute.xlu0 %543
        %v547 = vpack.i.b16 %v540, %v537
        %v548 = vshrl.u32 %v537, 16
        %v549 = vshrl.u32 %v540, 16
        %v550 = vpack.i.b16 %v549, %v548
        %v553 = vpack.i.b16 %v544, %v542
        %v554 = vshrl.u32 %v542, 16
        %v555 = vshrl.u32 %v544, 16
        %v556 = vpack.i.b16 %v555, %v554
        %v559 = vunpack.c.l.s4 1983009808
        %v560 = vunpack.c.0.s8 %v559
        %v561 = vperm.slane %v547, %v560
        %v564 = vunpack.c.l.s4 1983009808
        %v565 = vunpack.c.0.s8 %v564
        %v566 = vperm.slane %v553, %v565
        %v567 = vrot.slane %v566, 4
        %v568 = vsel %vm436, %v567, %v561
        %v569 = vrot.slane %v561, 4
        %v570 = vsel %vm436, %v566, %v569
        %v572 = vunpack.c.l.s4 1934713408
        %v573 = vunpack.c.0.s8 %v572
        %v574 = vperm.slane %v568, %v573
        %v576 = vunpack.c.l.s4 1934713408
        %v577 = vunpack.c.0.s8 %v576
        %v578 = vperm.slane %v570, %v577
        %v579 = vrot.slane %v574, 4
        %v580 = vsel %vm436, 0, %v579
        %v581 = vrot.slane %v578, 4
        %v582 = vsel %vm436, 0, %v581
        %v585 = vunpack.c.l.s4 1983009808
        %v586 = vunpack.c.0.s8 %v585
        %v587 = vperm.slane %v550, %v586
        %v590 = vunpack.c.l.s4 1983009808
        %v591 = vunpack.c.0.s8 %v590
        %v592 = vperm.slane %v556, %v591
        %v593 = vrot.slane %v592, 4
        %v594 = vsel %vm436, %v593, %v587
        %v595 = vrot.slane %v587, 4
        %v596 = vsel %vm436, %v592, %v595
        %v598 = vunpack.c.l.s4 1934713408
        %v599 = vunpack.c.0.s8 %v598
        %v600 = vperm.slane %v594, %v599
        %v602 = vunpack.c.l.s4 1934713408
        %v603 = vunpack.c.0.s8 %v602
        %v604 = vperm.slane %v596, %v603
        %v605 = vrot.slane %v600, 4
        %v606 = vsel %vm436, 0, %v605
        %v607 = vrot.slane %v604, 4
        %v608 = vsel %vm436, 0, %v607
        %v609 = vsel %vm436, %v581, %v574
        %v611 = vunpack.c.l.s4 1983009808
        %v612 = vunpack.c.0.s8 %v611
        %v613 = vperm.slane %v609, %v612
        %v614 = vrot.slane %v582, 4
        %v615 = vsel %vm436, %v614, %v580
        %v617 = vunpack.c.l.s4 1983009808
        %v618 = vunpack.c.0.s8 %v617
        %v619 = vperm.slane %v615, %v618
        %v620 = vrot.slane %v619, 4
        %v621 = vsel %vm436, %v620, %v613
        %v623 = vunpack.c.l.s4 1934713408
        %v624 = vunpack.c.0.s8 %v623
        %v625 = vperm.slane %v621, %v624
        %v626 = vrot.slane %v625, 4
        %v627 = vsel %vm436, 0, %v626
        %v628 = vsel %vm436, %v607, %v600
        %v630 = vunpack.c.l.s4 1983009808
        %v631 = vunpack.c.0.s8 %v630
        %v632 = vperm.slane %v628, %v631
        %v633 = vrot.slane %v608, 4
        %v634 = vsel %vm436, %v633, %v606
        %v636 = vunpack.c.l.s4 1983009808
        %v637 = vunpack.c.0.s8 %v636
        %v638 = vperm.slane %v634, %v637
        %v639 = vrot.slane %v638, 4
        %v640 = vsel %vm436, %v639, %v632
        %v642 = vunpack.c.l.s4 1934713408
        %v643 = vunpack.c.0.s8 %v642
        %v644 = vperm.slane %v640, %v643
        %v645 = vrot.slane %v644, 4
        %v646 = vsel %vm436, 0, %v645
        %v649 = vpack.i.b16 %v644, %v625
        %v651 = vshrl.u32 %v625, 16
        %v652 = vshrl.u32 %v644, 16
        %v653 = vpack.i.b16 %v652, %v651
        %v657 = vpack.i.b16 %v646, %v627
        %v659 = vshrl.u32 %v627, 16
        %v660 = vshrl.u32 %v646, 16
        %v661 = vpack.i.b16 %v660, %v659
        %663 = vst.msk [vmem:[%s331] sm:$0xf] %vm532, %v649
        %664 = vst.msk [vmem:[%s331 + $0x4] sm:$0xf] %vm532, %v653
        %665 = vst.msk [vmem:[%s331 + $0x8] sm:$0xf] %vm532, %v657
        %666 = vst.msk [vmem:[%s331 + $0xc] sm:$0xf] %vm532, %v661
        %s667 = sand.u32 %s162, 1
        %s668 = scalar_lea.sflag [#allocation4], %s667
        %s669 = sand.u32 %s162, 1
        %s670 = smul.addr %s669, 16
        %s671 = scalar_lea.vmem [#allocation8], %s670
        %s672 = sand.u32 %s190, 1
        %s673 = scalar_lea.sflag [#allocation10], %s672
        %s674 = sand.u32 %s190, 1
        %s675 = smul.addr %s674, 16
        %s676 = scalar_lea.vmem [#allocation9], %s675
        // Predicated region
        $region53: #{tpu_custom_call.1} parent=39 // pred_check
          %p677 = pneg %p172
        $region54: #{tpu_custom_call.1} parent=39 // pred_check_branch
          %679 = sbr.rel (%p677) target = $region56
        $region55: #{tpu_custom_call.1} parent=39 // pred_region
          %681 = vsyncadd %s668, 0
          %s682 = smul.addr %s32, 4
          %s683 = sadd.s32 %s33, %s682
          %s684 = smul.addr %s683, 4
          %s685 = scalar_lea.hbm %s5, %s684
          %s686 = sshll.u32 %s671, 4
          %s687 = int_to_ptr.vmem [resolvable:$true] %s686
          %s688 = sshll.u32 %s685, 4
          %s689 = int_to_ptr.hbm [resolvable:$true] %s688
          %694 = dma.vmem_to_hbm [thread:$0]  %s687, 256, %s689, %s668, 64, 64, 4
        $region56: #{tpu_custom_call.1} parent=39 // pred_fallthru
          _
        // Predicated region
        $region57: #{tpu_custom_call.1} parent=39 // pred_check
          %p695 = pneg %p200
        $region58: #{tpu_custom_call.1} parent=39 // pred_check_branch
          %697 = sbr.rel (%p695) target = $region60
        $region59: #{tpu_custom_call.1} parent=39 // pred_region
          %699 = vsyncadd %s673, 0
          %s700 = smul.addr %s32, 4
          %s701 = sadd.s32 %s33, %s700
          %s702 = smul.addr %s701, 4
          %s703 = scalar_lea.hbm %s6, %s702
          %s704 = sshll.u32 %s676, 4
          %s705 = int_to_ptr.vmem [resolvable:$true] %s704
          %s706 = sshll.u32 %s703, 4
          %s707 = int_to_ptr.hbm [resolvable:$true] %s706
          %712 = dma.vmem_to_hbm [thread:$0]  %s705, 256, %s707, %s673, 64, 64, 4
        $region60: #{tpu_custom_call.1} parent=39 // pred_fallthru
          _
      $region40: #{tpu_custom_call.1} parent=5 // pred_fallthru
        _
      %p713 = scmp.le.s32.totalorder 2, %s23
      // Predicated region
      $region61: #{tpu_custom_call.1} parent=5 // pred_check
        %p714 = pneg %p713
      $region62: #{tpu_custom_call.1} parent=5 // pred_check_branch
        %716 = sbr.rel (%p714) target = $region64
      $region63: #{tpu_custom_call.1} parent=5 // pred_region
        %s717 = ssub.s32 %s23, 2
        // Predicated region
        $region65: #{tpu_custom_call.1} parent=63 // pred_check
          %p718 = pneg %p178
        $region66: #{tpu_custom_call.1} parent=63 // pred_check_branch
          %720 = sbr.rel (%p718) target = $region68
        $region67: #{tpu_custom_call.1} parent=63 // pred_region
          %s721 = sand.u32 %s163, 1
          %s722 = scalar_lea.sflag [#allocation4], %s721
          %s723 = sand.u32 %s163, 1
          %s724 = smul.addr %s723, 16
          %s725 = scalar_lea.vmem [#allocation8], %s724
          %727 = dma.done %s722, 256
        $region68: #{tpu_custom_call.1} parent=63 // pred_fallthru
          _
        // Predicated region
        $region69: #{tpu_custom_call.1} parent=63 // pred_check
          %p728 = pneg %p206
        $region70: #{tpu_custom_call.1} parent=63 // pred_check_branch
          %730 = sbr.rel (%p728) target = $region72
        $region71: #{tpu_custom_call.1} parent=63 // pred_region
          %s731 = sand.u32 %s191, 1
          %s732 = scalar_lea.sflag [#allocation10], %s731
          %s733 = sand.u32 %s191, 1
          %s734 = smul.addr %s733, 16
          %s735 = scalar_lea.vmem [#allocation9], %s734
          %737 = dma.done %s732, 256
        $region72: #{tpu_custom_call.1} parent=63 // pred_fallthru
          _
      $region64: #{tpu_custom_call.1} parent=5 // pred_fallthru
        _
    $region6: #{tpu_custom_call.1} parent=1 // loop_footer
      %s27 = sadd.s32 1, %s23
    $region7: #{tpu_custom_call.1} parent=1 // loop_footer_branch
      %22 = sbr.rel target = $region3
    $region8: #{tpu_custom_call.1} parent=1 // loop_exit
      _
    %738 = vsyncpa [#allocation3], 1
    %s739 = scalar_lea.sflag [#allocation3], 1
    %740 = vsyncpa %s739, 1
    %741 = vsyncpa [#allocation6], 1
    %742 = vsyncpa [#allocation4], 1
    %s743 = scalar_lea.sflag [#allocation4], 1
    %744 = vsyncpa %s743, 1
    %745 = vsyncpa [#allocation10], 1
    %s746 = scalar_lea.sflag [#allocation10], 1
    %747 = vsyncpa %s746, 1

</llo_original>
